<compile_context>
chip_gen: v6e
topology: v6e:2x2x1
jax: 0.10.0
libtpu: 0.0.40
codegen_flags: <defaults>
</compile_context>

<pallas_src>
import functools

import jax
import jax.numpy as jnp
from jax.experimental import pallas as pl
from jax.experimental.pallas import tpu as pltpu

LANES = 128
DEFAULT_R_TILE = 1024  # 1024 * 128 * 4 B = 512 KiB per f32 input buffer


def _sq_err_kernel(preds_ref, gt_ref, o_ref, *, r_tile, r_rows, needs_mask):
    """preds_ref: (1, r_tile, 128) slice of preds[t] for this R tile.
    gt_ref:    (r_tile, 128) matching gt tile (resident across the T loop).
    o_ref:     (1, SUB, 128) f32 partial-sum accumulator for this R tile."""
    t = pl.program_id(1)

    @pl.when(t == 0)
    def _():
        o_ref[...] = jnp.zeros_like(o_ref)

    p = preds_ref[0].astype(jnp.float32)   # (r_tile, 128)
    g = gt_ref[...].astype(jnp.float32)    # (r_tile, 128)
    diff = p - g
    sq = diff * diff

    if needs_mask:
        # Last R tile is ragged: zero out rows beyond the true extent
        # (out-of-bounds block data is unspecified, so mask before reducing).
        row = jax.lax.broadcasted_iota(jnp.int32, (r_tile, LANES), 0)
        valid = (row + pl.program_id(0) * r_tile) < r_rows
        sq = jnp.where(valid, sq, jnp.float32(0.0))

    if r_tile % 8 == 0:
        # Fold groups of 8 sublanes with VPU adds into the (8, 128) accumulator.
        o_ref[0] += jnp.sum(sq.reshape(r_tile // 8, 8, LANES), axis=0)
    else:
        # Tiny-input fallback (r_rows < 8): (1, 128) accumulator.
        o_ref[0] += jnp.sum(sq, axis=0, keepdims=True)


def iterative_discriminator_loss(preds: jax.Array, gt: jax.Array,
                                 *, r_tile: int = DEFAULT_R_TILE) -> jax.Array:
    """preds: (T, *gt.shape); gt: any shape.  Returns scalar float32 equal to
    sum_t mean((preds[t] - gt)**2)."""
    T = preds.shape[0]
    assert preds.shape[1:] == gt.shape, "each preds[t] must match gt shape"
    numel = int(gt.size)

    preds2d = preds.reshape(T, numel)   # free reshape, native dtype
    gt1d = gt.reshape(numel)

    main = (numel // LANES) * LANES
    r_rows = main // LANES
    tail = numel - main

    # Sub-128-lane tail: tiny pure-JAX sum (avoids padding/copying the whole
    # tensor just to round numel up to a lane multiple).
    tail_sum = jnp.float32(0.0)
    if tail:
        p_tail = preds2d[:, main:].astype(jnp.float32)
        g_tail = gt1d[main:].astype(jnp.float32)
        tail_sum = jnp.sum((p_tail - g_tail[None, :]) ** 2)

    if r_rows == 0:
        # Degenerate input (numel < 128): nothing for the kernel to do.
        return tail_sum / jnp.float32(numel)

    if tail:
        preds_main, gt_main = preds2d[:, :main], gt1d[:main]
    else:
        preds_main, gt_main = preds2d, gt1d   # no slice/copy in aligned case
    preds3d = preds_main.reshape(T, r_rows, LANES)
    gt2d = gt_main.reshape(r_rows, LANES)

    r_tile = r_tile if r_rows > r_tile else r_rows   # full-extent block if small
    num_r = pl.cdiv(r_rows, r_tile)
    needs_mask = (r_rows % r_tile) != 0
    sub = 8 if r_tile % 8 == 0 else 1

    kernel = functools.partial(_sq_err_kernel, r_tile=r_tile, r_rows=r_rows,
                               needs_mask=needs_mask)

    partials = pl.pallas_call(
        kernel,
        out_shape=jax.ShapeDtypeStruct((num_r, sub, LANES), jnp.float32),
        grid_spec=pltpu.PrefetchScalarGridSpec(
            num_scalar_prefetch=0,
            grid=(num_r, T),                      # R tiles outer, T inner
            in_specs=[
                pl.BlockSpec((1, r_tile, LANES), lambda r, t: (t, r, 0)),
                pl.BlockSpec((r_tile, LANES), lambda r, t: (r, 0)),  # t-invariant
            ],
            out_specs=pl.BlockSpec((1, sub, LANES), lambda r, t: (r, 0, 0)),
        ),
        compiler_params=pltpu.CompilerParams(
            dimension_semantics=("parallel", "arbitrary")),
    )(preds3d, gt2d)

    # Final cross-lane reduce + mean denominator in the wrapper (kept out of
    # the per-step kernel path).
    total = jnp.sum(partials) + tail_sum
    return total / jnp.float32(numel)


def _reference(preds, gt):
    # Pure-JAX reference matching PyTorch: sum_t mean((preds[t]-gt)**2)
    return jnp.sum(jnp.mean((preds - gt[None]) ** 2,
                            axis=tuple(range(1, preds.ndim))))


if __name__ == "__main__":
    key = jax.random.PRNGKey(0)
    k1, k2, k3, k4 = jax.random.split(key, 4)

    # Test 1: f32 NCHW maps, lane-aligned numel (single R tile, no masking).
    T, B, C, H, W = 3, 2, 4, 16, 16
    preds = jax.random.normal(k1, (T, B, C, H, W), dtype=jnp.float32)
    gt = jax.random.normal(k2, (B, C, H, W), dtype=jnp.float32)
    loss = jax.block_until_ready(iterative_discriminator_loss(preds, gt))
    ref = jax.block_until_ready(_reference(preds, gt))
    assert jnp.allclose(loss, ref, rtol=1e-5, atol=1e-5), (loss, ref)

    # Test 2: bf16 inputs, ragged lane tail + ragged last R tile (small r_tile
    # forces multiple R tiles so the masked path and partial outputs run).
    T2, B2, C2, H2, W2 = 2, 2, 4, 18, 17   # numel = 2448 = 19*128 + 16
    preds2 = jax.random.normal(k3, (T2, B2, C2, H2, W2), dtype=jnp.bfloat16)
    gt2 = jax.random.normal(k4, (B2, C2, H2, W2), dtype=jnp.bfloat16)
    loss2 = jax.block_until_ready(
        iterative_discriminator_loss(preds2, gt2, r_tile=8))
    ref2 = jax.block_until_ready(
        _reference(preds2.astype(jnp.float32), gt2.astype(jnp.float32)))
    assert jnp.allclose(loss2, ref2, rtol=1e-4, atol=1e-4), (loss2, ref2)

    print("KERNEL_OK")
</pallas_src>

<mosaic_0001>
module attributes {stable_mosaic.version = 11 : i64} {
  func.func @_sq_err_kernel(%arg0: i32, %arg1: i32, %arg2: memref<1x16x128xf32, #tpu.memory_space<vmem>>, %arg3: memref<16x128xf32, #tpu.memory_space<vmem>>, %arg4: memref<1x8x128xf32, #tpu.memory_space<vmem>>) attributes {dimension_semantics = [#tpu.dimension_semantics<parallel>, #tpu.dimension_semantics<arbitrary>], iteration_bounds = array<i64: 1, 3>, scalar_prefetch = 0 : i64, scratch_operands = 0 : i64, tpu.core_type = #tpu.core_type<tc>, window_params = [{transform_indices = @transform_0, window_bounds = array<i64: 1, 16, 128>}, {transform_indices = @transform_1, window_bounds = array<i64: 16, 128>}, {transform_indices = @transform_2, window_bounds = array<i64: 1, 8, 128>}]} {
    %c0_i32 = arith.constant 0 : i32
    %0 = arith.cmpi eq, %arg1, %c0_i32 : i32
    %1 = arith.extui %0 : i1 to i32
    %c0_i32_0 = arith.constant 0 : i32
    %2 = arith.cmpi ne, %1, %c0_i32_0 : i32
    scf.if %2 {
      %cst_11 = arith.constant 0.000000e+00 : f32
      %16 = vector.broadcast %cst_11 : f32 to vector<1x8x128xf32>
      %c0_12 = arith.constant 0 : index
      %c0_13 = arith.constant 0 : index
      %c0_14 = arith.constant 0 : index
      %17 = vector.load %arg4[%c0_12, %c0_13, %c0_14] : memref<1x8x128xf32, #tpu.memory_space<vmem>>, vector<1x8x128xf32>
      tpu.vector_store %arg4[%c0_12, %c0_13, %c0_14], %16 {strides = array<i32>} : memref<1x8x128xf32, #tpu.memory_space<vmem>>, vector<1x8x128xf32>,
    } else {
    }
    %c0 = arith.constant 0 : index
    %c0_1 = arith.constant 0 : index
    %c0_2 = arith.constant 0 : index
    %3 = vector.load %arg2[%c0, %c0_1, %c0_2] : memref<1x16x128xf32, #tpu.memory_space<vmem>>, vector<1x16x128xf32>
    %4 = vector.shape_cast %3 : vector<1x16x128xf32> to vector<16x128xf32>
    %c0_3 = arith.constant 0 : index
    %c0_4 = arith.constant 0 : index
    %5 = vector.load %arg3[%c0_3, %c0_4] : memref<16x128xf32, #tpu.memory_space<vmem>>, vector<16x128xf32>
    %6 = arith.subf %4, %5 : vector<16x128xf32>
    %7 = arith.mulf %6, %6 : vector<16x128xf32>
    %c0_5 = arith.constant 0 : index
    %c0_6 = arith.constant 0 : index
    %c0_7 = arith.constant 0 : index
    %8 = vector.load %arg4[%c0_5, %c0_6, %c0_7] : memref<1x8x128xf32, #tpu.memory_space<vmem>>, vector<1x8x128xf32>
    %9 = vector.shape_cast %8 : vector<1x8x128xf32> to vector<8x128xf32>
    %10 = vector.shape_cast %7 : vector<16x128xf32> to vector<2x8x128xf32>
    %cst = arith.constant dense<0.000000e+00> : vector<8x128xf32>
    %11 = vector.multi_reduction <add>, %10, %cst [0] : vector<2x8x128xf32> to vector<8x128xf32>
    %12 = arith.addf %9, %11 : vector<8x128xf32>
    %c0_8 = arith.constant 0 : index
    %c0_9 = arith.constant 0 : index
    %c0_10 = arith.constant 0 : index
    %13 = vector.load %arg4[%c0_8, %c0_9, %c0_10] : memref<1x8x128xf32, #tpu.memory_space<vmem>>, vector<1x8x128xf32>
    %14 = vector.shape_cast %13 : vector<1x8x128xf32> to vector<8x128xf32>
    %15 = vector.shape_cast %12 : vector<8x128xf32> to vector<1x8x128xf32>
    tpu.vector_store %arg4[%c0_8, %c0_9, %c0_10], %15 {strides = array<i32>} : memref<1x8x128xf32, #tpu.memory_space<vmem>>, vector<1x8x128xf32>,
    return
  }
  func.func @transform_0(%arg0: i32, %arg1: i32) -> (i32, i32, i32) {
    %c0_i32 = arith.constant 0 : i32
    %c0_i32_0 = arith.constant 0 : i32
    return %arg1, %arg0, %c0_i32 : i32, i32, i32
  }
  func.func @transform_1(%arg0: i32, %arg1: i32) -> (i32, i32) {
    %c0_i32 = arith.constant 0 : i32
    %c0_i32_0 = arith.constant 0 : i32
    return %arg0, %c0_i32 : i32, i32
  }
  func.func @transform_2(%arg0: i32, %arg1: i32) -> (i32, i32, i32) {
    %c0_i32 = arith.constant 0 : i32
    %c0_i32_0 = arith.constant 0 : i32
    %c0_i32_1 = arith.constant 0 : i32
    return %arg0, %c0_i32, %c0_i32_0 : i32, i32, i32
  }
}

</mosaic_0001>

<llo_original>
// kernel: tpu_custom_call.1
$region0: #{tpu_custom_call.1}
  #allocation0 [shape = 'u32[]', space=smem, size = 0x4, offset = 0x4, fixed_abs, tag = 'smem constant byte address 0x4 - core index']
  #allocation1 [shape = 'u32[144,128]{1,0:T(1,128)}', space=vmem, size = 0x12000, scoped, tag = 'internal scratch']
  %s0 = inlined_call_operand.hbm [shape: f32[3,16,128], index: 0, kind: input, shape index: {}]
  %s1 = inlined_call_operand.hbm [shape: f32[16,128], index: 1, kind: input, shape index: {}]
  %s2 = inlined_call_operand.hbm [shape: f32[1,8,128], index: 2, kind: output, shape index: {}]
  %s3 = sld [smem:[#allocation0]]
  $region53: #{tpu_custom_call.1} parent=0
    _
  %s5 = ssub.s32 1, %s3
  %s6 = scalar_select 0, %s5, %s3
  $region1: #{tpu_custom_call.1} parent=0
    #allocation2 [shape = 'u8[16384]{0}', space=vmem, size = 0x4000, scoped, tag = 'input window, operand 0']
    #allocation3 [shape = 's32[2]{0}', space=sflag, size = 0x8, scoped, tag = 'scoped memory for tpu_custom_call.1']
    #allocation4 [shape = 's32[2]{0}', space=sflag, size = 0x8, scoped, tag = 'scoped memory for tpu_custom_call.1']
    #allocation5 [shape = 'u8[8192]{0}', space=vmem, size = 0x2000, scoped, tag = 'input window, operand 1, single buffered']
    #allocation6 [shape = 's32[1]{0}', space=sflag, size = 0x4, scoped, tag = 'scoped memory for tpu_custom_call.1']
    #allocation7 [shape = 'u8[4096]{0}', space=vmem, size = 0x1000, scoped, tag = 'output window, operand 0, single buffered']
    %7 = vsyncpa [#allocation3], 0
    %s8 = scalar_lea.sflag [#allocation3], 1
    %9 = vsyncpa %s8, 0
    %10 = vsyncpa [#allocation6], 0
    %11 = vsyncpa [#allocation4], 0
    loop: start=0, step=1, limit=5
    $region2: #{tpu_custom_call.1} parent=1 // loop_pre_header
      _
    $region3: #{tpu_custom_call.1} parent=1 // loop_header
      %s13 = sphi 0, %s17
      %p14 = scmp.ge.s32.totalorder %s13, 5
      %s20 = sphi 0, %s32
      %s21 = sphi 0, %s28
      %s22 = sphi 0, %s20
      %s23 = sphi 0, %s21
      %s24 = sphi 0, %s22
      %s25 = sphi 0, %s23
      %s37 = sphi 0, %s39
      %s40 = sphi 0, %s37
      %s41 = sphi 0, %s40
      %s57 = sphi 0, %s41
      %s63 = sphi 0, %s65
      %s66 = sphi 0, %s63
      %s67 = sphi 0, %s66
      %s83 = sphi 0, %s67
      %s89 = sphi 0, %s91
      %s92 = sphi 0, %s89
      %s93 = sphi 0, %s92
      %s109 = sphi 0, %s93
    $region4: #{tpu_custom_call.1} parent=1 // loop_header_branch
      %16 = sbr.rel (%p14) target = $region8
    $region5: #{tpu_custom_call.1} parent=1 // loop_body
      %s18 = ssub.s32 %s13, 1
      %s19 = ssub.s32 %s13, 2
      %s26 = sadd.s32 1, %s21
      %p27 = scmp.ge.s32.totalorder %s26, 3
      %s28 = scalar_select %p27, 0, %s26
      %s29 = sadd.s32 1, %s20
      %s30 = scalar_select %p27, %s29, %s20
      %p31 = scmp.ge.s32.totalorder %s30, 1
      %s32 = scalar_select %p31, 0, %s30
      %s33 = ssub.s32 %s21, %s28
      %s34 = ssub.s32 %s20, %s32
      %s35 = sor.u32 %s33, %s34
      %p36 = scmp.eq.s32.totalorder %s35, 0
      %s38 = sadd.s32 %s37, 1
      %s39 = scalar_select %p36, %s37, %s38
      %p42 = pneg %p36
      %p43 = scmp.eq.s32.totalorder %s13, 2
      %p44 = por %p42, %p43
      %p45 = scmp.ne.s32.totalorder %s37, %s40
      %p46 = scmp.eq.s32.totalorder %s13, 0
      %p47 = por %p45, %p46
      %p48 = scmp.ne.s32.totalorder %s37, %s40
      %p49 = scmp.eq.s32.totalorder %s18, 2
      %p50 = por %p48, %p49
      %p51 = scmp.ne.s32.totalorder %s40, %s41
      %p52 = scmp.eq.s32.totalorder %s18, 0
      %p53 = por %p51, %p52
      %p54 = scmp.ne.s32.totalorder %s40, %s41
      %p55 = scmp.eq.s32.totalorder %s19, 2
      %p56 = por %p54, %p55
      %p58 = scmp.ne.s32.totalorder %s41, %s57
      %p59 = scmp.eq.s32.totalorder %s19, 0
      %p60 = por %p58, %p59
      %s61 = ssub.s32 %s20, %s32
      %p62 = scmp.eq.s32.totalorder %s61, 0
      %s64 = sadd.s32 %s63, 1
      %s65 = scalar_select %p62, %s63, %s64
      %p68 = pneg %p62
      %p69 = scmp.eq.s32.totalorder %s13, 2
      %p70 = por %p68, %p69
      %p71 = scmp.ne.s32.totalorder %s63, %s66
      %p72 = scmp.eq.s32.totalorder %s13, 0
      %p73 = por %p71, %p72
      %p74 = scmp.ne.s32.totalorder %s63, %s66
      %p75 = scmp.eq.s32.totalorder %s18, 2
      %p76 = por %p74, %p75
      %p77 = scmp.ne.s32.totalorder %s66, %s67
      %p78 = scmp.eq.s32.totalorder %s18, 0
      %p79 = por %p77, %p78
      %p80 = scmp.ne.s32.totalorder %s66, %s67
      %p81 = scmp.eq.s32.totalorder %s19, 2
      %p82 = por %p80, %p81
      %p84 = scmp.ne.s32.totalorder %s67, %s83
      %p85 = scmp.eq.s32.totalorder %s19, 0
      %p86 = por %p84, %p85
      %s87 = ssub.s32 %s20, %s32
      %p88 = scmp.eq.s32.totalorder %s87, 0
      %s90 = sadd.s32 %s89, 1
      %s91 = scalar_select %p88, %s89, %s90
      %p94 = pneg %p88
      %p95 = scmp.eq.s32.totalorder %s13, 2
      %p96 = por %p94, %p95
      %p97 = scmp.ne.s32.totalorder %s89, %s92
      %p98 = scmp.eq.s32.totalorder %s13, 0
      %p99 = por %p97, %p98
      %p100 = scmp.ne.s32.totalorder %s89, %s92
      %p101 = scmp.eq.s32.totalorder %s18, 2
      %p102 = por %p100, %p101
      %p103 = scmp.ne.s32.totalorder %s92, %s93
      %p104 = scmp.eq.s32.totalorder %s18, 0
      %p105 = por %p103, %p104
      %p106 = scmp.ne.s32.totalorder %s92, %s93
      %p107 = scmp.eq.s32.totalorder %s19, 2
      %p108 = por %p106, %p107
      %p110 = scmp.ne.s32.totalorder %s93, %s109
      %p111 = scmp.eq.s32.totalorder %s19, 0
      %p112 = por %p110, %p111
      %p113 = scmp.le.s32.totalorder 1, %s13
      %p114 = scmp.lt.s32.totalorder %s13, 4
      %p115 = pnand %p113, %p114
      %p116 = pneg %p115
      // Predicated region
      $region9: #{tpu_custom_call.1} parent=5 // pred_check
        _
      $region10: #{tpu_custom_call.1} parent=5 // pred_check_branch
        %118 = sbr.rel (%p115) target = $region12
      $region11: #{tpu_custom_call.1} parent=5 // pred_region
        %s119 = ssub.s32 %s13, 1
        // Predicated region
        $region13: #{tpu_custom_call.1} parent=11 // pred_check
          %p120 = pneg %p79
        $region14: #{tpu_custom_call.1} parent=11 // pred_check_branch
          %122 = sbr.rel (%p120) target = $region16
        $region15: #{tpu_custom_call.1} parent=11 // pred_region
          %s123 = smul.u32 2, %s22
          %s125 = ssub.s32 256, 256
          %126 = vsyncadd [#allocation6], %s125
          %s127 = smul.addr %s123, 128
          %s128 = scalar_lea.hbm %s1, %s127
          %s129 = sshll.u32 [#allocation5], 4
          %s130 = int_to_ptr.vmem [resolvable:$true] %s129
          %135 = dma.hbm_to_vmem [thread:$0]  %s128, 256, %s130, [#allocation6], 128, 128, 8
        $region16: #{tpu_custom_call.1} parent=11 // pred_fallthru
          _
      $region12: #{tpu_custom_call.1} parent=5 // pred_fallthru
        _
      %p136 = scmp.lt.s32.totalorder %s13, 3
      // Predicated region
      $region17: #{tpu_custom_call.1} parent=5 // pred_check
        %p137 = pneg %p136
      $region18: #{tpu_custom_call.1} parent=5 // pred_check_branch
        %139 = sbr.rel (%p137) target = $region20
      $region19: #{tpu_custom_call.1} parent=5 // pred_region
        // Predicated region
        $region21: #{tpu_custom_call.1} parent=19 // pred_check
          %p140 = pneg %p47
        $region22: #{tpu_custom_call.1} parent=19 // pred_check_branch
          %142 = sbr.rel (%p140) target = $region24
        $region23: #{tpu_custom_call.1} parent=19 // pred_region
          %s143 = sand.u32 %s37, 1
          %s144 = scalar_lea.sflag [#allocation3], %s143
          %s145 = sand.u32 %s37, 1
          %s146 = smul.addr %s145, 16
          %s147 = scalar_lea.vmem [#allocation2], %s146
          %s148 = smul.u32 2, %s20
          %s150 = ssub.s32 256, 256
          %151 = vsyncadd %s144, %s150
          %s152 = smul.addr %s21, 2
          %s153 = sadd.s32 %s148, %s152
          %s154 = smul.addr %s153, 128
          %s155 = scalar_lea.hbm %s0, %s154
          %s156 = sshll.u32 %s147, 4
          %s157 = int_to_ptr.vmem [resolvable:$true] %s156
          %162 = dma.hbm_to_vmem [thread:$0]  %s155, 256, %s157, %s144, 128, 128, 8
        $region24: #{tpu_custom_call.1} parent=19 // pred_fallthru
          _
      $region20: #{tpu_custom_call.1} parent=5 // pred_fallthru
        _
      %p163 = scmp.le.s32.totalorder 1, %s13
      %p164 = scmp.lt.s32.totalorder %s13, 4
      %p165 = pnand %p163, %p164
      %p166 = pneg %p165
      // Predicated region
      $region25: #{tpu_custom_call.1} parent=5 // pred_check
        _
      $region26: #{tpu_custom_call.1} parent=5 // pred_check_branch
        %168 = sbr.rel (%p165) target = $region28
      $region27: #{tpu_custom_call.1} parent=5 // pred_region
        %s169 = ssub.s32 %s13, 1
        %s170 = sand.u32 %s40, 1
        %s171 = scalar_lea.sflag [#allocation3], %s170
        %s172 = sand.u32 %s40, 1
        %s173 = smul.addr %s172, 16
        %s174 = scalar_lea.vmem [#allocation2], %s173
        // Predicated region
        $region29: #{tpu_custom_call.1} parent=27 // pred_check
          %p175 = pneg %p53
        $region30: #{tpu_custom_call.1} parent=27 // pred_check_branch
          %177 = sbr.rel (%p175) target = $region32
        $region31: #{tpu_custom_call.1} parent=27 // pred_region
          %178 = dma.done %s171, 256
        $region32: #{tpu_custom_call.1} parent=27 // pred_fallthru
          _
        // Predicated region
        $region33: #{tpu_custom_call.1} parent=27 // pred_check
          %p179 = pneg %p79
        $region34: #{tpu_custom_call.1} parent=27 // pred_check_branch
          %181 = sbr.rel (%p179) target = $region36
        $region35: #{tpu_custom_call.1} parent=27 // pred_region
          %182 = dma.done [#allocation6], 256
        $region36: #{tpu_custom_call.1} parent=27 // pred_fallthru
          _
        %s183 = sand.u32 %s40, 1
        %s184 = scalar_lea.sflag [#allocation3], %s183
        %s185 = sand.u32 %s40, 1
        %s186 = smul.addr %s185, 16
        %s187 = scalar_lea.vmem [#allocation2], %s186
        %p188 = pneg %p53
        %p189 = pneg %p50
        %p190 = pneg %p79
        %p191 = pneg %p76
        %p192 = pneg %p105
        %p193 = pneg %p102
        %s194 = smul.u32 2, %s22
        %s195 = smul.u32 2, %s22
        %p196 = scmp.eq.s32.totalorder %s23, 0
        // Predicated region
        $region37: #{tpu_custom_call.1} parent=27 // pred_check
          %p197 = pneg %p196
        $region38: #{tpu_custom_call.1} parent=27 // pred_check_branch
          %199 = sbr.rel (%p197) target = $region40
        $region39: #{tpu_custom_call.1} parent=27 // pred_region
          %200 = vst [vmem:[#allocation7] sm:$0xff] 0.0
        $region40: #{tpu_custom_call.1} parent=27 // pred_fallthru
          _
        %v201 = vld [vmem:[%s174] sm:$0xff]
        %v202 = vld [vmem:[%s174 + $0x8] sm:$0xff]
        %v203 = vld [vmem:[#allocation5] sm:$0xff]
        %v204 = vld [vmem:[#allocation5 + $0x8] sm:$0xff]
        %v205 = vsub.f32 %v201, %v203
        %v206 = vsub.f32 %v202, %v204
        %v207 = vmul.f32 %v205, %v205
        %v208 = vmul.f32 %v206, %v206
        %v209 = vld [vmem:[#allocation7] sm:$0xff]
        %v210 = vadd.f32 %v207, %v208
        %v211 = vadd.f32 %v209, %v210
        %212 = vst [vmem:[#allocation7] sm:$0xff] %v211
        // Predicated region
        $region41: #{tpu_custom_call.1} parent=27 // pred_check
          %p213 = pneg %p102
        $region42: #{tpu_custom_call.1} parent=27 // pred_check_branch
          %215 = sbr.rel (%p213) target = $region44
        $region43: #{tpu_custom_call.1} parent=27 // pred_region
          %s217 = ssub.s32 128, 128
          %218 = vsyncadd [#allocation4], %s217
          %s219 = smul.addr %s22, 128
          %s220 = scalar_lea.hbm %s2, %s219
          %s222 = sshll.u32 [#allocation7], 4
          %s223 = int_to_ptr.vmem [resolvable:$true] %s222
          %225 = dma.vmem_to_hbm [thread:$0]  %s223, 128, %s220, [#allocation4]
        $region44: #{tpu_custom_call.1} parent=27 // pred_fallthru
          _
        // Predicated region
        $region45: #{tpu_custom_call.1} parent=27 // pred_check
          %p226 = pneg %p102
        $region46: #{tpu_custom_call.1} parent=27 // pred_check_branch
          %228 = sbr.rel (%p226) target = $region48
        $region47: #{tpu_custom_call.1} parent=27 // pred_region
          %229 = dma.done [#allocation4], 128
        $region48: #{tpu_custom_call.1} parent=27 // pred_fallthru
          _
      $region28: #{tpu_custom_call.1} parent=5 // pred_fallthru
        _
      %p230 = scmp.le.s32.totalorder 2, %s13
      // Predicated region
      $region49: #{tpu_custom_call.1} parent=5 // pred_check
        %p231 = pneg %p230
      $region50: #{tpu_custom_call.1} parent=5 // pred_check_branch
        %233 = sbr.rel (%p231) target = $region52
      $region51: #{tpu_custom_call.1} parent=5 // pred_region
        %s234 = ssub.s32 %s13, 2
      $region52: #{tpu_custom_call.1} parent=5 // pred_fallthru
        _
    $region6: #{tpu_custom_call.1} parent=1 // loop_footer
      %s17 = sadd.s32 1, %s13
    $region7: #{tpu_custom_call.1} parent=1 // loop_footer_branch
      %12 = sbr.rel target = $region3
    $region8: #{tpu_custom_call.1} parent=1 // loop_exit
      _
    %235 = vsyncpa [#allocation3], 1
    %s236 = scalar_lea.sflag [#allocation3], 1
    %237 = vsyncpa %s236, 1
    %238 = vsyncpa [#allocation6], 1
    %239 = vsyncpa [#allocation4], 1
    %s240 = scalar_lea.sflag [#allocation4], 1
    %241 = vsyncpa %s240, 1

</llo_original>
